<compile_context>
chip_gen: v7x
topology: tpu7x:2x2x1
jax: 0.10.0
libtpu: 0.0.40
codegen_flags: <defaults>
</compile_context>

<pallas_src>
import math

import jax
import jax.numpy as jnp
from jax.experimental import pallas as pl
from jax.experimental.pallas import tpu as pltpu

LANE = 128
_SQRT_HALF = 1.0 / math.sqrt(2.0)
_BN_EPS = 1e-5


def _round_up(x, m):
    return (x + m - 1) // m * m


def _make_gelu(approx):
    if approx:
        # tanh approximation -> transcendental goes to the (otherwise idle) EUP.
        return lambda x: jax.nn.gelu(x, approximate=True)
    # F.gelu default: 0.5 * x * (1 + erf(x / sqrt(2)))
    return lambda x: 0.5 * x * (1.0 + jax.lax.erf(x * _SQRT_HALF))


# ---------------------------------------------------------------------------
# Kernel
# ---------------------------------------------------------------------------
def _make_kernel(num_layers, true_b, b_pad, tile_b, has_padding, act_dtype,
                 approx_gelu):
    """Kernel over grid=(n_batch_tiles,).

    Param refs (all whole-array VMEM-resident, single-buffered):
      W0 (in_dim, Hp) bf16, W1..W_{L-1} (Hp, Hp) bf16, W_final (Hp, Op) bf16,
      vecs (3*L, Hp) f32 with rows [b_0, gamma_0, beta_0, b_1, ...],
      b_final (1, Op) f32.
    """
    gelu = _make_gelu(approx_gelu)
    inv_b = 1.0 / float(true_b)
    n_chunks = b_pad // tile_b          # also == number of streamed batch tiles
    n_weights = num_layers + 1          # W0, hidden Ws, W_final

    def kernel(x_ref, *refs):
        w_refs = refs[:n_weights]
        vecs_ref = refs[n_weights]
        bfin_ref = refs[n_weights + 1]
        out_ref = refs[n_weights + 2]
        act_ref = refs[n_weights + 3]   # (b_pad, Hp) resident pre-BN activations
        sum_ref = refs[n_weights + 4]   # (1, Hp) f32 running sum(x)
        sq_ref = refs[n_weights + 5]    # (1, Hp) f32 running sum(x^2)

        i = pl.program_id(0)
        n_tiles = pl.num_programs(0)

        @pl.when(i == 0)
        def _init():
            sum_ref[...] = jnp.zeros_like(sum_ref)
            sq_ref[...] = jnp.zeros_like(sq_ref)

        def accumulate_stats(h, chunk_idx):
            """Add sum / sum-of-squares of the valid rows of h."""
            if not has_padding:
                sum_ref[...] += jnp.sum(h, axis=0, keepdims=True)
                sq_ref[...] += jnp.sum(h * h, axis=0, keepdims=True)
                return
            # Batch padding (if any) lives entirely in the last chunk.
            is_pad_chunk = chunk_idx == n_chunks - 1

            @pl.when(jnp.logical_not(is_pad_chunk))
            def _plain():
                sum_ref[...] += jnp.sum(h, axis=0, keepdims=True)
                sq_ref[...] += jnp.sum(h * h, axis=0, keepdims=True)

            @pl.when(is_pad_chunk)
            def _masked():
                row = (jax.lax.broadcasted_iota(jnp.int32, (tile_b, 1), 0)
                       + chunk_idx * tile_b)
                m = (row < true_b).astype(jnp.float32)
                hm = h * m
                sum_ref[...] += jnp.sum(hm, axis=0, keepdims=True)
                sq_ref[...] += jnp.sum(hm * h, axis=0, keepdims=True)

        # ---- streaming phase: layer 0 (single fused dot) on this tile -------
        b0 = vecs_ref[0:1, :]
        h = jnp.dot(x_ref[...].astype(jnp.bfloat16), w_refs[0][...],
                    preferred_element_type=jnp.float32) + b0
        h = gelu(h)
        accumulate_stats(h, i)
        start = pl.multiple_of(i * tile_b, tile_b)
        act_ref[pl.ds(start, tile_b), :] = h.astype(act_dtype)

        # ---- after the last tile: BN + remaining layers, row-tiled ----------
        @pl.when(i == n_tiles - 1)
        def _finalize():
            def bn_affine(layer_idx):
                # Fold training-mode BatchNorm (batch mean, biased variance)
                # into a per-feature scale/shift from the accumulators.
                gamma = vecs_ref[3 * layer_idx + 1:3 * layer_idx + 2, :]
                beta = vecs_ref[3 * layer_idx + 2:3 * layer_idx + 3, :]
                mean = sum_ref[...] * inv_b
                # NOTE: E[x^2]-E[x]^2 in f32; fine for post-GELU magnitudes.
                var = sq_ref[...] * inv_b - mean * mean
                scale = gamma * jax.lax.rsqrt(var + _BN_EPS)
                shift = beta - mean * scale
                return scale, shift

            unroll = n_chunks <= 4

            # Hidden layers 1..L-1: one fused sweep per layer
            # (apply BN_{l-1}+GELU, Linear_l+GELU, accumulate stats_l).
            for l in range(1, num_layers):
                scale, shift = bn_affine(l - 1)
                sum_ref[...] = jnp.zeros_like(sum_ref)
                sq_ref[...] = jnp.zeros_like(sq_ref)
                bias = vecs_ref[3 * l:3 * l + 1, :]

                def body(c, carry, scale=scale, shift=shift, bias=bias, l=l):
                    s = pl.multiple_of(c * tile_b, tile_b)
                    a = act_ref[pl.ds(s, tile_b), :].astype(jnp.float32)
                    a = gelu(a * scale + shift)                 # BN_{l-1} + GELU
                    hh = jnp.dot(a.astype(jnp.bfloat16), w_refs[l][...],
                                 preferred_element_type=jnp.float32) + bias
                    hh = gelu(hh)                                # Linear_l + GELU
                    accumulate_stats(hh, c)
                    act_ref[pl.ds(s, tile_b), :] = hh.astype(act_dtype)
                    return carry

                jax.lax.fori_loop(0, n_chunks, body, 0, unroll=unroll)

            # Final layer: BN_{L-1} + GELU -> Linear -> write output.
            scale, shift = bn_affine(num_layers - 1)
            b_fin = bfin_ref[...]

            def final_body(c, carry):
                s = pl.multiple_of(c * tile_b, tile_b)
                a = act_ref[pl.ds(s, tile_b), :].astype(jnp.float32)
                a = gelu(a * scale + shift)
                y = jnp.dot(a.astype(jnp.bfloat16), w_refs[num_layers][...],
                            preferred_element_type=jnp.float32) + b_fin
                out_ref[pl.ds(s, tile_b), :] = y.astype(out_ref.dtype)
                return carry

            jax.lax.fori_loop(0, n_chunks, final_body, 0, unroll=unroll)

    return kernel


# ---------------------------------------------------------------------------
# Wrapper
# ---------------------------------------------------------------------------
def node_network_forward(node_features, aggregated_features, padded_params, *,
                         num_layers, output_dim, tile_rows=2048,
                         act_dtype=jnp.bfloat16, approx_gelu=False):
    b = node_features.shape[0]
    # Column-stack the two inputs once in HBM: one streamed block and a single
    # fused layer-0 dot with K = node_dim + 2*edge_dim.
    x_in = jnp.concatenate([node_features, aggregated_features], axis=-1)
    in_dim = x_in.shape[1]
    hidden_pad = padded_params[0].shape[1]
    out_pad = padded_params[-1].shape[1]
    act_dtype = jnp.dtype(act_dtype)

    tile_b = min(tile_rows, _round_up(b, 8))
    b_pad = _round_up(b, tile_b)
    n_tiles = b_pad // tile_b
    has_padding = b_pad != b
    if has_padding:
        x_in = jnp.pad(x_in, ((0, b_pad - b), (0, 0)))

    kernel = _make_kernel(num_layers, b, b_pad, tile_b, has_padding, act_dtype,
                          approx_gelu)

    # Streamed activations: pipelined (double-buffered) blocks over batch.
    in_specs = [pl.BlockSpec((tile_b, in_dim), lambda i: (i, 0))]
    # Weights / packed vectors: whole-array, single-buffered, VMEM-resident for
    # the entire grid (copied from HBM exactly once).
    in_specs += [pl.BlockSpec(memory_space=pltpu.MemorySpace.VMEM)
                 for _ in padded_params]

    out_specs = pl.BlockSpec((b_pad, out_pad), lambda i: (0, 0))

    # --- explicit VMEM budget, validated against physical VMEM ---------------
    act_bytes = b_pad * hidden_pad * act_dtype.itemsize
    out_bytes = b_pad * out_pad * 4
    par_bytes = sum(int(p.size) * jnp.dtype(p.dtype).itemsize
                    for p in padded_params)
    in_bytes = 2 * tile_b * in_dim * 4                       # double-buffered stream
    tmp_bytes = 6 * tile_b * max(hidden_pad, out_pad) * 4    # finalize chunk temps
    vmem_needed = (act_bytes + out_bytes + par_bytes + in_bytes + tmp_bytes
                   + (4 << 20))

    try:
        phys_vmem = int(pltpu.get_tpu_info().vmem_capacity_bytes)
    except Exception:
        phys_vmem = 64 << 20   # conservative fallback (v7x per-core size)
    if vmem_needed > int(0.85 * phys_vmem):
        # TODO(synk): fall back to a per-layer HBM-staged sweep for very large
        # batches (required to scale on v7x's 64 MiB VMEM).
        raise ValueError(
            f"Resident footprint {vmem_needed / 2**20:.1f} MiB exceeds 85% of "
            f"physical VMEM ({phys_vmem / 2**20:.0f} MiB); reduce the batch.")
    vmem_limit = int(vmem_needed)

    flops = 2 * b_pad * in_dim * hidden_pad
    flops += 2 * b_pad * hidden_pad * hidden_pad * (num_layers - 1)
    flops += 2 * b_pad * hidden_pad * out_pad
    transcendentals = 2 * num_layers * b_pad * hidden_pad
    bytes_accessed = b_pad * in_dim * 4 + par_bytes + b_pad * out_pad * 4

    out = pl.pallas_call(
        kernel,
        out_shape=jax.ShapeDtypeStruct((b_pad, out_pad), jnp.float32),
        grid=(n_tiles,),
        in_specs=in_specs,
        out_specs=out_specs,
        scratch_shapes=[
            pltpu.VMEM((b_pad, hidden_pad), act_dtype),
            pltpu.VMEM((1, hidden_pad), jnp.float32),
            pltpu.VMEM((1, hidden_pad), jnp.float32),
        ],
        compiler_params=pltpu.CompilerParams(
            # BN statistics accumulate across batch tiles -> "arbitrary".
            dimension_semantics=("arbitrary",),
            vmem_limit_bytes=vmem_limit,
        ),
        cost_estimate=pl.CostEstimate(
            flops=int(flops),
            transcendentals=int(transcendentals),
            bytes_accessed=int(bytes_accessed)),
    )(x_in, *padded_params)

    return out[:b, :output_dim]


# ---------------------------------------------------------------------------
# Parameter construction (mirrors nn.Linear / nn.BatchNorm1d defaults)
# ---------------------------------------------------------------------------
def init_raw_params(key, node_dim, edge_dim, hidden_dim, output_dim, num_layers):
    in_dim = node_dim + 2 * edge_dim
    layers = []
    dims = [(in_dim, hidden_dim)] + [(hidden_dim, hidden_dim)] * (num_layers - 1)
    for fan_in, fan_out in dims:
        key, kw, kb = jax.random.split(key, 3)
        bound = 1.0 / math.sqrt(fan_in)
        w = jax.random.uniform(kw, (fan_in, fan_out), jnp.float32, -bound, bound)
        b = jax.random.uniform(kb, (fan_out,), jnp.float32, -bound, bound)
        gamma = jnp.ones((fan_out,), jnp.float32)
        beta = jnp.zeros((fan_out,), jnp.float32)
        layers.append((w, b, gamma, beta))
    key, kw, kb = jax.random.split(key, 3)
    bound = 1.0 / math.sqrt(hidden_dim)
    wf = jax.random.uniform(kw, (hidden_dim, output_dim), jnp.float32, -bound, bound)
    bf = jax.random.uniform(kb, (output_dim,), jnp.float32, -bound, bound)
    return layers, (wf, bf)


def pad_params_for_kernel(raw_layers, final):
    """Packs parameters: [W0, W1, ..., W_final] (bf16, lane-padded),
    vecs (3L, Hp) f32 with rows [b_l, gamma_l, beta_l]*, b_final (1, Op) f32."""
    hidden = raw_layers[0][0].shape[1]
    out_dim = final[0].shape[1]
    hidden_pad = _round_up(hidden, LANE)
    out_pad = _round_up(out_dim, LANE)

    def pad_mat(a, rows, cols):
        return jnp.pad(a, ((0, rows - a.shape[0]), (0, cols - a.shape[1])))

    def pad_vec(v, cols):
        return jnp.pad(v, (0, cols - v.shape[0]))

    weights = []
    w0 = raw_layers[0][0]
    weights.append(pad_mat(w0, w0.shape[0], hidden_pad).astype(jnp.bfloat16))
    for (w, _, _, _) in raw_layers[1:]:
        weights.append(pad_mat(w, hidden_pad, hidden_pad).astype(jnp.bfloat16))
    wf, bf = final
    weights.append(pad_mat(wf, hidden_pad, out_pad).astype(jnp.bfloat16))

    rows = []
    for (_, b, g, bt) in raw_layers:
        rows += [pad_vec(b, hidden_pad), pad_vec(g, hidden_pad),
                 pad_vec(bt, hidden_pad)]
    vecs = jnp.stack(rows, axis=0)                    # (3L, Hp) f32
    b_final = pad_vec(bf, out_pad).reshape(1, out_pad)
    return weights + [vecs, b_final], hidden_pad, out_pad


# ---------------------------------------------------------------------------
# Pure-JAX reference (module semantics; same bf16-in / f32-acc matmul precision;
# resident_dtype mirrors the kernel's activation-residency precision)
# ---------------------------------------------------------------------------
def reference_forward(node_features, aggregated_features, raw_layers, final, *,
                      resident_dtype=jnp.float32):
    gelu = _make_gelu(False)
    x = jnp.concatenate([node_features, aggregated_features], axis=-1)
    for (w, b, g, bt) in raw_layers:
        y = jnp.dot(x.astype(jnp.bfloat16), w.astype(jnp.bfloat16),
                    preferred_element_type=jnp.float32) + b
        y = gelu(y)
        mean = jnp.mean(y, axis=0, keepdims=True)
        var = jnp.mean((y - mean) ** 2, axis=0, keepdims=True)
        # Mirror the kernel's VMEM residency precision of pre-BN activations.
        y = y.astype(resident_dtype).astype(jnp.float32)
        y = (y - mean) * jax.lax.rsqrt(var + _BN_EPS) * g + bt
        x = gelu(y)
    wf, bf = final
    return jnp.dot(x.astype(jnp.bfloat16), wf.astype(jnp.bfloat16),
                   preferred_element_type=jnp.float32) + bf


# ---------------------------------------------------------------------------
if __name__ == "__main__":
    node_dim = 16      # embedding size
    edge_dim = 16      # aggregated_features has 2 * edge_dim columns
    hidden_dim = 32
    output_dim = 16

    def run_case(batch, num_layers, *, tile_rows, act_dtype, tol):
        key = jax.random.PRNGKey(0)
        k_node, k_agg, k_par = jax.random.split(key, 3)
        node = jax.random.normal(k_node, (batch, node_dim), jnp.float32)
        agg = jax.random.normal(k_agg, (batch, 2 * edge_dim), jnp.float32)
        raw_layers, final = init_raw_params(k_par, node_dim, edge_dim,
                                            hidden_dim, output_dim, num_layers)
        padded_params, _, _ = pad_params_for_kernel(raw_layers, final)

        out = node_network_forward(node, agg, padded_params,
                                   num_layers=num_layers, output_dim=output_dim,
                                   tile_rows=tile_rows, act_dtype=act_dtype)
        out = jax.block_until_ready(out)
        assert out.shape == (batch, output_dim)

        ref = reference_forward(node, agg, raw_layers, final,
                                resident_dtype=act_dtype)
        err = float(jnp.max(jnp.abs(out - ref)))
        assert jnp.allclose(out, ref, atol=tol, rtol=tol), (
            f"batch={batch} L={num_layers} act={jnp.dtype(act_dtype).name}: "
            f"max abs diff {err} > {tol}")

        if jnp.dtype(act_dtype) != jnp.float32:
            # Sanity: the capacity mode stays close to full-f32 BN semantics.
            ref_f32 = reference_forward(node, agg, raw_layers, final,
                                        resident_dtype=jnp.float32)
            assert jnp.allclose(out, ref_f32, atol=1e-1, rtol=1e-1)
        return err

    # 1) f32-resident activations, single tile, no padding: tight check.
    run_case(8, 2, tile_rows=2048, act_dtype=jnp.float32, tol=2e-3)
    # 2) multi-tile streaming + batch padding + 3 layers (f32 residents).
    run_case(20, 3, tile_rows=8, act_dtype=jnp.float32, tol=2e-3)
    # 3) default bf16-resident activations (VMEM-capacity mode), checked
    #    tightly against a reference that mirrors the bf16 residency.
    run_case(64, 2, tile_rows=2048, act_dtype=jnp.bfloat16, tol=2e-3)

    print("KERNEL_OK")
</pallas_src>

<mosaic_0001>
module attributes {stable_mosaic.version = 11 : i64} {
  func.func @kernel(%arg0: i32, %arg1: memref<8x48xf32, #tpu.memory_space<vmem>>, %arg2: memref<48x128xbf16, #tpu.memory_space<vmem>>, %arg3: memref<128x128xbf16, #tpu.memory_space<vmem>>, %arg4: memref<128x128xbf16, #tpu.memory_space<vmem>>, %arg5: memref<6x128xf32, #tpu.memory_space<vmem>>, %arg6: memref<1x128xf32, #tpu.memory_space<vmem>>, %arg7: memref<8x128xf32, #tpu.memory_space<vmem>>, %arg8: memref<8x128xf32, #tpu.memory_space<vmem>>, %arg9: memref<1x128xf32, #tpu.memory_space<vmem>>, %arg10: memref<1x128xf32, #tpu.memory_space<vmem>>) attributes {dimension_semantics = [#tpu.dimension_semantics<arbitrary>], iteration_bounds = array<i64: 1>, scalar_prefetch = 0 : i64, scratch_operands = 3 : i64, tpu.core_type = #tpu.core_type<tc>, window_params = [{transform_indices = @transform_0, window_bounds = array<i64: 8, 48>}, {pipeline_mode = #tpu.pipeline_mode<synchronous>, transform_indices = @transform_1, window_bounds = array<i64: 48, 128>}, {pipeline_mode = #tpu.pipeline_mode<synchronous>, transform_indices = @transform_2, window_bounds = array<i64: 128, 128>}, {pipeline_mode = #tpu.pipeline_mode<synchronous>, transform_indices = @transform_3, window_bounds = array<i64: 128, 128>}, {pipeline_mode = #tpu.pipeline_mode<synchronous>, transform_indices = @transform_4, window_bounds = array<i64: 6, 128>}, {pipeline_mode = #tpu.pipeline_mode<synchronous>, transform_indices = @transform_5, window_bounds = array<i64: 1, 128>}, {pipeline_mode = #tpu.pipeline_mode<synchronous>, transform_indices = @transform_6, window_bounds = array<i64: 8, 128>}]} {
    %c0_i32 = arith.constant 0 : i32
    %0 = arith.cmpi eq, %arg0, %c0_i32 : i32
    %1 = arith.extui %0 : i1 to i32
    %c0_i32_0 = arith.constant 0 : i32
    %2 = arith.cmpi ne, %1, %c0_i32_0 : i32
    scf.if %2 {
      %cst_22 = arith.constant 0.000000e+00 : f32
      %36 = vector.broadcast %cst_22 : f32 to vector<1x128xf32>
      %c0_23 = arith.constant 0 : index
      %c0_24 = arith.constant 0 : index
      %37 = vector.load %arg9[%c0_23, %c0_24] : memref<1x128xf32, #tpu.memory_space<vmem>>, vector<1x128xf32>
      tpu.vector_store %arg9[%c0_23, %c0_24], %36 {strides = array<i32>} : memref<1x128xf32, #tpu.memory_space<vmem>>, vector<1x128xf32>,
      %cst_25 = arith.constant 0.000000e+00 : f32
      %38 = vector.broadcast %cst_25 : f32 to vector<1x128xf32>
      %c0_26 = arith.constant 0 : index
      %c0_27 = arith.constant 0 : index
      %39 = vector.load %arg10[%c0_26, %c0_27] : memref<1x128xf32, #tpu.memory_space<vmem>>, vector<1x128xf32>
      tpu.vector_store %arg10[%c0_26, %c0_27], %38 {strides = array<i32>} : memref<1x128xf32, #tpu.memory_space<vmem>>, vector<1x128xf32>,
    } else {
    }
    %c0 = arith.constant 0 : index
    %c0_1 = arith.constant 0 : index
    %3 = vector.load %arg5[%c0, %c0_1] : memref<6x128xf32, #tpu.memory_space<vmem>>, vector<1x128xf32>
    %c0_2 = arith.constant 0 : index
    %c0_3 = arith.constant 0 : index
    %4 = vector.load %arg1[%c0_2, %c0_3] : memref<8x48xf32, #tpu.memory_space<vmem>>, vector<8x48xf32>
    %5 = arith.truncf %4 : vector<8x48xf32> to vector<8x48xbf16>
    %c0_4 = arith.constant 0 : index
    %c0_5 = arith.constant 0 : index
    %6 = vector.load %arg2[%c0_4, %c0_5] : memref<48x128xbf16, #tpu.memory_space<vmem>>, vector<48x128xbf16>
    %cst = arith.constant dense<0.000000e+00> : vector<8x128xf32>
    %7 = tpu.matmul %5, %6, %cst {dimension_numbers = #tpu.dot_dimension_numbers<[1], [0], [0], [1], [0, 0, 1, 1], [], []>} : vector<8x48xbf16>, vector<48x128xbf16>, vector<8x128xf32> -> vector<8x128xf32>
    %8 = vector.broadcast %3 : vector<1x128xf32> to vector<8x128xf32>
    %9 = arith.addf %7, %8 : vector<8x128xf32>
    %cst_6 = arith.constant 5.000000e-01 : f32
    %10 = vector.broadcast %cst_6 : f32 to vector<8x128xf32>
    %11 = arith.mulf %10, %9 : vector<8x128xf32>
    %cst_7 = arith.constant 0.707106769 : f32
    %12 = vector.broadcast %cst_7 : f32 to vector<8x128xf32>
    %13 = arith.mulf %9, %12 : vector<8x128xf32>
    %14 = math.erf %13 : vector<8x128xf32>
    %cst_8 = arith.constant 1.000000e+00 : f32
    %15 = vector.broadcast %cst_8 : f32 to vector<8x128xf32>
    %16 = arith.addf %15, %14 : vector<8x128xf32>
    %17 = arith.mulf %11, %16 : vector<8x128xf32>
    %c0_9 = arith.constant 0 : index
    %c0_10 = arith.constant 0 : index
    %18 = vector.load %arg9[%c0_9, %c0_10] : memref<1x128xf32, #tpu.memory_space<vmem>>, vector<1x128xf32>
    %cst_11 = arith.constant dense<0.000000e+00> : vector<128xf32>
    %19 = vector.multi_reduction <add>, %17, %cst_11 [0] : vector<8x128xf32> to vector<128xf32>
    %20 = vector.shape_cast %19 : vector<128xf32> to vector<1x128xf32>
    %21 = arith.addf %18, %20 : vector<1x128xf32>
    %c0_12 = arith.constant 0 : index
    %c0_13 = arith.constant 0 : index
    %22 = vector.load %arg9[%c0_12, %c0_13] : memref<1x128xf32, #tpu.memory_space<vmem>>, vector<1x128xf32>
    tpu.vector_store %arg9[%c0_12, %c0_13], %21 {strides = array<i32>} : memref<1x128xf32, #tpu.memory_space<vmem>>, vector<1x128xf32>,
    %c0_14 = arith.constant 0 : index
    %c0_15 = arith.constant 0 : index
    %23 = vector.load %arg10[%c0_14, %c0_15] : memref<1x128xf32, #tpu.memory_space<vmem>>, vector<1x128xf32>
    %24 = arith.mulf %17, %17 : vector<8x128xf32>
    %cst_16 = arith.constant dense<0.000000e+00> : vector<128xf32>
    %25 = vector.multi_reduction <add>, %24, %cst_16 [0] : vector<8x128xf32> to vector<128xf32>
    %26 = vector.shape_cast %25 : vector<128xf32> to vector<1x128xf32>
    %27 = arith.addf %23, %26 : vector<1x128xf32>
    %c0_17 = arith.constant 0 : index
    %c0_18 = arith.constant 0 : index
    %28 = vector.load %arg10[%c0_17, %c0_18] : memref<1x128xf32, #tpu.memory_space<vmem>>, vector<1x128xf32>
    tpu.vector_store %arg10[%c0_17, %c0_18], %27 {strides = array<i32>} : memref<1x128xf32, #tpu.memory_space<vmem>>, vector<1x128xf32>,
    %c8_i32 = arith.constant 8 : i32
    %29 = arith.muli %arg0, %c8_i32 : i32
    %30 = tpu.assume_multiple %29, 8 : i32
    %31 = arith.index_cast %30 : i32 to index
    %c0_19 = arith.constant 0 : index
    %32 = vector.load %arg8[%31, %c0_19] : memref<8x128xf32, #tpu.memory_space<vmem>>, vector<8x128xf32>
    tpu.vector_store %arg8[%31, %c0_19], %17 {strides = array<i32>} : memref<8x128xf32, #tpu.memory_space<vmem>>, vector<8x128xf32>,
    %c0_i32_20 = arith.constant 0 : i32
    %33 = arith.cmpi eq, %arg0, %c0_i32_20 : i32
    %34 = arith.extui %33 : i1 to i32
    %c0_i32_21 = arith.constant 0 : i32
    %35 = arith.cmpi ne, %34, %c0_i32_21 : i32
    scf.if %35 {
      %c1 = arith.constant 1 : index
      %c0_22 = arith.constant 0 : index
      %36 = vector.load %arg5[%c1, %c0_22] : memref<6x128xf32, #tpu.memory_space<vmem>>, vector<1x128xf32>
      %c2 = arith.constant 2 : index
      %c0_23 = arith.constant 0 : index
      %37 = vector.load %arg5[%c2, %c0_23] : memref<6x128xf32, #tpu.memory_space<vmem>>, vector<1x128xf32>
      %c0_24 = arith.constant 0 : index
      %c0_25 = arith.constant 0 : index
      %38 = vector.load %arg9[%c0_24, %c0_25] : memref<1x128xf32, #tpu.memory_space<vmem>>, vector<1x128xf32>
      %cst_26 = arith.constant 1.250000e-01 : f32
      %39 = vector.broadcast %cst_26 : f32 to vector<1x128xf32>
      %40 = arith.mulf %38, %39 : vector<1x128xf32>
      %c0_27 = arith.constant 0 : index
      %c0_28 = arith.constant 0 : index
      %41 = vector.load %arg10[%c0_27, %c0_28] : memref<1x128xf32, #tpu.memory_space<vmem>>, vector<1x128xf32>
      %cst_29 = arith.constant 1.250000e-01 : f32
      %42 = vector.broadcast %cst_29 : f32 to vector<1x128xf32>
      %43 = arith.mulf %41, %42 : vector<1x128xf32>
      %44 = arith.mulf %40, %40 : vector<1x128xf32>
      %45 = arith.subf %43, %44 : vector<1x128xf32>
      %cst_30 = arith.constant 9.99999974E-6 : f32
      %46 = vector.broadcast %cst_30 : f32 to vector<1x128xf32>
      %47 = arith.addf %45, %46 : vector<1x128xf32>
      %48 = math.rsqrt %47 : vector<1x128xf32>
      %49 = arith.mulf %36, %48 : vector<1x128xf32>
      %50 = arith.mulf %40, %49 : vector<1x128xf32>
      %51 = arith.subf %37, %50 : vector<1x128xf32>
      %cst_31 = arith.constant 0.000000e+00 : f32
      %52 = vector.broadcast %cst_31 : f32 to vector<1x128xf32>
      %c0_32 = arith.constant 0 : index
      %c0_33 = arith.constant 0 : index
      %53 = vector.load %arg9[%c0_32, %c0_33] : memref<1x128xf32, #tpu.memory_space<vmem>>, vector<1x128xf32>
      tpu.vector_store %arg9[%c0_32, %c0_33], %52 {strides = array<i32>} : memref<1x128xf32, #tpu.memory_space<vmem>>, vector<1x128xf32>,
      %cst_34 = arith.constant 0.000000e+00 : f32
      %54 = vector.broadcast %cst_34 : f32 to vector<1x128xf32>
      %c0_35 = arith.constant 0 : index
      %c0_36 = arith.constant 0 : index
      %55 = vector.load %arg10[%c0_35, %c0_36] : memref<1x128xf32, #tpu.memory_space<vmem>>, vector<1x128xf32>
      tpu.vector_store %arg10[%c0_35, %c0_36], %54 {strides = array<i32>} : memref<1x128xf32, #tpu.memory_space<vmem>>, vector<1x128xf32>,
      %c3 = arith.constant 3 : index
      %c0_37 = arith.constant 0 : index
      %56 = vector.load %arg5[%c3, %c0_37] : memref<6x128xf32, #tpu.memory_space<vmem>>, vector<1x128xf32>
      %c0_i32_38 = arith.constant 0 : i32
      %c8_i32_39 = arith.constant 8 : i32
      %57 = arith.muli %c0_i32_38, %c8_i32_39 : i32
      %58 = tpu.assume_multiple %57, 8 : i32
      %59 = arith.index_cast %58 : i32 to index
      %c0_40 = arith.constant 0 : index
      %60 = vector.load %arg8[%59, %c0_40] : memref<8x128xf32, #tpu.memory_space<vmem>>, vector<8x128xf32>
      %61 = vector.broadcast %49 : vector<1x128xf32> to vector<8x128xf32>
      %62 = arith.mulf %60, %61 : vector<8x128xf32>
      %63 = vector.broadcast %51 : vector<1x128xf32> to vector<8x128xf32>
      %64 = arith.addf %62, %63 : vector<8x128xf32>
      %cst_41 = arith.constant 5.000000e-01 : f32
      %65 = vector.broadcast %cst_41 : f32 to vector<8x128xf32>
      %66 = arith.mulf %65, %64 : vector<8x128xf32>
      %cst_42 = arith.constant 0.707106769 : f32
      %67 = vector.broadcast %cst_42 : f32 to vector<8x128xf32>
      %68 = arith.mulf %64, %67 : vector<8x128xf32>
      %69 = math.erf %68 : vector<8x128xf32>
      %cst_43 = arith.constant 1.000000e+00 : f32
      %70 = vector.broadcast %cst_43 : f32 to vector<8x128xf32>
      %71 = arith.addf %70, %69 : vector<8x128xf32>
      %72 = arith.mulf %66, %71 : vector<8x128xf32>
      %73 = arith.truncf %72 : vector<8x128xf32> to vector<8x128xbf16>
      %c0_44 = arith.constant 0 : index
      %c0_45 = arith.constant 0 : index
      %74 = vector.load %arg3[%c0_44, %c0_45] : memref<128x128xbf16, #tpu.memory_space<vmem>>, vector<128x128xbf16>
      %cst_46 = arith.constant dense<0.000000e+00> : vector<8x128xf32>
      %75 = tpu.matmul %73, %74, %cst_46 {dimension_numbers = #tpu.dot_dimension_numbers<[1], [0], [0], [1], [0, 0, 1, 1], [], []>} : vector<8x128xbf16>, vector<128x128xbf16>, vector<8x128xf32> -> vector<8x128xf32>
      %76 = vector.broadcast %56 : vector<1x128xf32> to vector<8x128xf32>
      %77 = arith.addf %75, %76 : vector<8x128xf32>
      %cst_47 = arith.constant 5.000000e-01 : f32
      %78 = vector.broadcast %cst_47 : f32 to vector<8x128xf32>
      %79 = arith.mulf %78, %77 : vector<8x128xf32>
      %cst_48 = arith.constant 0.707106769 : f32
      %80 = vector.broadcast %cst_48 : f32 to vector<8x128xf32>
      %81 = arith.mulf %77, %80 : vector<8x128xf32>
      %82 = math.erf %81 : vector<8x128xf32>
      %cst_49 = arith.constant 1.000000e+00 : f32
      %83 = vector.broadcast %cst_49 : f32 to vector<8x128xf32>
      %84 = arith.addf %83, %82 : vector<8x128xf32>
      %85 = arith.mulf %79, %84 : vector<8x128xf32>
      %c0_50 = arith.constant 0 : index
      %c0_51 = arith.constant 0 : index
      %86 = vector.load %arg9[%c0_50, %c0_51] : memref<1x128xf32, #tpu.memory_space<vmem>>, vector<1x128xf32>
      %cst_52 = arith.constant dense<0.000000e+00> : vector<128xf32>
      %87 = vector.multi_reduction <add>, %85, %cst_52 [0] : vector<8x128xf32> to vector<128xf32>
      %88 = vector.shape_cast %87 : vector<128xf32> to vector<1x128xf32>
      %89 = arith.addf %86, %88 : vector<1x128xf32>
      %c0_53 = arith.constant 0 : index
      %c0_54 = arith.constant 0 : index
      %90 = vector.load %arg9[%c0_53, %c0_54] : memref<1x128xf32, #tpu.memory_space<vmem>>, vector<1x128xf32>
      tpu.vector_store %arg9[%c0_53, %c0_54], %89 {strides = array<i32>} : memref<1x128xf32, #tpu.memory_space<vmem>>, vector<1x128xf32>,
      %c0_55 = arith.constant 0 : index
      %c0_56 = arith.constant 0 : index
      %91 = vector.load %arg10[%c0_55, %c0_56] : memref<1x128xf32, #tpu.memory_space<vmem>>, vector<1x128xf32>
      %92 = arith.mulf %85, %85 : vector<8x128xf32>
      %cst_57 = arith.constant dense<0.000000e+00> : vector<128xf32>
      %93 = vector.multi_reduction <add>, %92, %cst_57 [0] : vector<8x128xf32> to vector<128xf32>
      %94 = vector.shape_cast %93 : vector<128xf32> to vector<1x128xf32>
      %95 = arith.addf %91, %94 : vector<1x128xf32>
      %c0_58 = arith.constant 0 : index
      %c0_59 = arith.constant 0 : index
      %96 = vector.load %arg10[%c0_58, %c0_59] : memref<1x128xf32, #tpu.memory_space<vmem>>, vector<1x128xf32>
      tpu.vector_store %arg10[%c0_58, %c0_59], %95 {strides = array<i32>} : memref<1x128xf32, #tpu.memory_space<vmem>>, vector<1x128xf32>,
      %97 = arith.index_cast %58 : i32 to index
      %c0_60 = arith.constant 0 : index
      %98 = vector.load %arg8[%97, %c0_60] : memref<8x128xf32, #tpu.memory_space<vmem>>, vector<8x128xf32>
      tpu.vector_store %arg8[%97, %c0_60], %85 {strides = array<i32>} : memref<8x128xf32, #tpu.memory_space<vmem>>, vector<8x128xf32>,
      %c1_i32 = arith.constant 1 : i32
      %c4 = arith.constant 4 : index
      %c0_61 = arith.constant 0 : index
      %99 = vector.load %arg5[%c4, %c0_61] : memref<6x128xf32, #tpu.memory_space<vmem>>, vector<1x128xf32>
      %c5 = arith.constant 5 : index
      %c0_62 = arith.constant 0 : index
      %100 = vector.load %arg5[%c5, %c0_62] : memref<6x128xf32, #tpu.memory_space<vmem>>, vector<1x128xf32>
      %c0_63 = arith.constant 0 : index
      %c0_64 = arith.constant 0 : index
      %101 = vector.load %arg9[%c0_63, %c0_64] : memref<1x128xf32, #tpu.memory_space<vmem>>, vector<1x128xf32>
      %cst_65 = arith.constant 1.250000e-01 : f32
      %102 = vector.broadcast %cst_65 : f32 to vector<1x128xf32>
      %103 = arith.mulf %101, %102 : vector<1x128xf32>
      %c0_66 = arith.constant 0 : index
      %c0_67 = arith.constant 0 : index
      %104 = vector.load %arg10[%c0_66, %c0_67] : memref<1x128xf32, #tpu.memory_space<vmem>>, vector<1x128xf32>
      %cst_68 = arith.constant 1.250000e-01 : f32
      %105 = vector.broadcast %cst_68 : f32 to vector<1x128xf32>
      %106 = arith.mulf %104, %105 : vector<1x128xf32>
      %107 = arith.mulf %103, %103 : vector<1x128xf32>
      %108 = arith.subf %106, %107 : vector<1x128xf32>
      %cst_69 = arith.constant 9.99999974E-6 : f32
      %109 = vector.broadcast %cst_69 : f32 to vector<1x128xf32>
      %110 = arith.addf %108, %109 : vector<1x128xf32>
      %111 = math.rsqrt %110 : vector<1x128xf32>
      %112 = arith.mulf %99, %111 : vector<1x128xf32>
      %113 = arith.mulf %103, %112 : vector<1x128xf32>
      %114 = arith.subf %100, %113 : vector<1x128xf32>
      %c0_70 = arith.constant 0 : index
      %c0_71 = arith.constant 0 : index
      %115 = vector.load %arg6[%c0_70, %c0_71] : memref<1x128xf32, #tpu.memory_space<vmem>>, vector<1x128xf32>
      %c0_i32_72 = arith.constant 0 : i32
      %c8_i32_73 = arith.constant 8 : i32
      %116 = arith.muli %c0_i32_72, %c8_i32_73 : i32
      %117 = tpu.assume_multiple %116, 8 : i32
      %118 = arith.index_cast %117 : i32 to index
      %c0_74 = arith.constant 0 : index
      %119 = vector.load %arg8[%118, %c0_74] : memref<8x128xf32, #tpu.memory_space<vmem>>, vector<8x128xf32>
      %120 = vector.broadcast %112 : vector<1x128xf32> to vector<8x128xf32>
      %121 = arith.mulf %119, %120 : vector<8x128xf32>
      %122 = vector.broadcast %114 : vector<1x128xf32> to vector<8x128xf32>
      %123 = arith.addf %121, %122 : vector<8x128xf32>
      %cst_75 = arith.constant 5.000000e-01 : f32
      %124 = vector.broadcast %cst_75 : f32 to vector<8x128xf32>
      %125 = arith.mulf %124, %123 : vector<8x128xf32>
      %cst_76 = arith.constant 0.707106769 : f32
      %126 = vector.broadcast %cst_76 : f32 to vector<8x128xf32>
      %127 = arith.mulf %123, %126 : vector<8x128xf32>
      %128 = math.erf %127 : vector<8x128xf32>
      %cst_77 = arith.constant 1.000000e+00 : f32
      %129 = vector.broadcast %cst_77 : f32 to vector<8x128xf32>
      %130 = arith.addf %129, %128 : vector<8x128xf32>
      %131 = arith.mulf %125, %130 : vector<8x128xf32>
      %132 = arith.truncf %131 : vector<8x128xf32> to vector<8x128xbf16>
      %c0_78 = arith.constant 0 : index
      %c0_79 = arith.constant 0 : index
      %133 = vector.load %arg4[%c0_78, %c0_79] : memref<128x128xbf16, #tpu.memory_space<vmem>>, vector<128x128xbf16>
      %cst_80 = arith.constant dense<0.000000e+00> : vector<8x128xf32>
      %134 = tpu.matmul %132, %133, %cst_80 {dimension_numbers = #tpu.dot_dimension_numbers<[1], [0], [0], [1], [0, 0, 1, 1], [], []>} : vector<8x128xbf16>, vector<128x128xbf16>, vector<8x128xf32> -> vector<8x128xf32>
      %135 = vector.broadcast %115 : vector<1x128xf32> to vector<8x128xf32>
      %136 = arith.addf %134, %135 : vector<8x128xf32>
      %137 = arith.index_cast %117 : i32 to index
      %c0_81 = arith.constant 0 : index
      %138 = vector.load %arg7[%137, %c0_81] : memref<8x128xf32, #tpu.memory_space<vmem>>, vector<8x128xf32>
      tpu.vector_store %arg7[%137, %c0_81], %136 {strides = array<i32>} : memref<8x128xf32, #tpu.memory_space<vmem>>, vector<8x128xf32>,
      %c1_i32_82 = arith.constant 1 : i32
    } else {
    }
    return
  }
  func.func @transform_0(%arg0: i32) -> (i32, i32) {
    %c0_i32 = arith.constant 0 : i32
    %c0_i32_0 = arith.constant 0 : i32
    return %arg0, %c0_i32 : i32, i32
  }
  func.func @transform_1(%arg0: i32) -> (i32, i32) {
    %c0_i32 = arith.constant 0 : i32
    %c0_i32_0 = arith.constant 0 : i32
    %c0_i32_1 = arith.constant 0 : i32
    return %c0_i32, %c0_i32_0 : i32, i32
  }
  func.func @transform_2(%arg0: i32) -> (i32, i32) {
    %c0_i32 = arith.constant 0 : i32
    %c0_i32_0 = arith.constant 0 : i32
    %c0_i32_1 = arith.constant 0 : i32
    return %c0_i32, %c0_i32_0 : i32, i32
  }
  func.func @transform_3(%arg0: i32) -> (i32, i32) {
    %c0_i32 = arith.constant 0 : i32
    %c0_i32_0 = arith.constant 0 : i32
    %c0_i32_1 = arith.constant 0 : i32
    return %c0_i32, %c0_i32_0 : i32, i32
  }
  func.func @transform_4(%arg0: i32) -> (i32, i32) {
    %c0_i32 = arith.constant 0 : i32
    %c0_i32_0 = arith.constant 0 : i32
    %c0_i32_1 = arith.constant 0 : i32
    return %c0_i32, %c0_i32_0 : i32, i32
  }
  func.func @transform_5(%arg0: i32) -> (i32, i32) {
    %c0_i32 = arith.constant 0 : i32
    %c0_i32_0 = arith.constant 0 : i32
    %c0_i32_1 = arith.constant 0 : i32
    return %c0_i32, %c0_i32_0 : i32, i32
  }
  func.func @transform_6(%arg0: i32) -> (i32, i32) {
    %c0_i32 = arith.constant 0 : i32
    %c0_i32_0 = arith.constant 0 : i32
    %c0_i32_1 = arith.constant 0 : i32
    return %c0_i32, %c0_i32_0 : i32, i32
  }
}

</mosaic_0001>

<llo_original>
// kernel: tpu_custom_call.1
$region0: #{tpu_custom_call.1}
  #allocation0 [shape = 'u32[]', space=smem, size = 0x4, offset = 0x4, fixed_abs, tag = 'smem constant byte address 0x4 - core index']
  #allocation1 [shape = 'u32[144,128]{1,0:T(1,128)}', space=vmem, size = 0x12000, scoped, tag = 'internal scratch']
  #allocation2 [shape = 'f32[8,128]{1,0:T(8,128)}', space=vmem, size = 0x1000, scoped, tag = 'scratch operand']
  #allocation3 [shape = 'f32[1,128]{1,0:T(1,128)}', space=vmem, size = 0x200, scoped, tag = 'scratch operand']
  #allocation4 [shape = 'f32[1,128]{1,0:T(1,128)}', space=vmem, size = 0x200, scoped, tag = 'scratch operand']
  %s0 = inlined_call_operand.hbm [shape: f32[8,48], index: 0, kind: input, shape index: {}]
  %s1 = inlined_call_operand.hbm [shape: bf16[48,128], index: 1, kind: input, shape index: {}]
  %s2 = inlined_call_operand.hbm [shape: bf16[128,128], index: 2, kind: input, shape index: {}]
  %s3 = inlined_call_operand.hbm [shape: bf16[128,128], index: 3, kind: input, shape index: {}]
  %s4 = inlined_call_operand.vmem [shape: f32[6,128], index: 4, kind: input, shape index: {}]
  %s5 = inlined_call_operand.vmem [shape: f32[1,128], index: 5, kind: input, shape index: {}]
  %s6 = inlined_call_operand.hbm [shape: f32[8,128], index: 6, kind: output, shape index: {}]
  %s7 = sld [smem:[#allocation0]]
  $region58: #{tpu_custom_call.1} parent=0
    _
  %s9 = ssub.s32 1, %s7
  %s10 = scalar_select 0, %s9, %s7
  $region1: #{tpu_custom_call.1} parent=0
    #allocation5 [shape = 'u8[4096]{0}', space=vmem, size = 0x1000, scoped, tag = 'input window, operand 0, single buffered']
    #allocation6 [shape = 's32[1]{0}', space=sflag, size = 0x4, scoped, tag = 'scoped memory for tpu_custom_call.1']
    #allocation7 [shape = 's32[1]{0}', space=sflag, size = 0x4, scoped, tag = 'scoped memory for tpu_custom_call.1']
    #allocation8 [shape = 'u8[12288]{0}', space=vmem, size = 0x3000, scoped, tag = 'input window, operand 1, single buffered']
    #allocation9 [shape = 's32[1]{0}', space=sflag, size = 0x4, scoped, tag = 'scoped memory for tpu_custom_call.1']
    #allocation10 [shape = 'u8[32768]{0}', space=vmem, size = 0x8000, scoped, tag = 'input window, operand 2, single buffered']
    #allocation11 [shape = 'u8[32768]{0}', space=vmem, size = 0x8000, scoped, tag = 'input window, operand 3, single buffered']
    #allocation12 [shape = 's32[1]{0}', space=sflag, size = 0x4, scoped, tag = 'scoped memory for tpu_custom_call.1']
    #allocation13 [shape = 'u8[4096]{0}', space=vmem, size = 0x1000, scoped, tag = 'output window, operand 0, single buffered']
    %11 = vsyncpa [#allocation6], 0
    %12 = vsyncpa [#allocation9], 0
    %13 = vsyncpa [#allocation12], 0
    %14 = vsyncpa [#allocation7], 0
    // Predicated region
    $region2: #{tpu_custom_call.1} parent=1 // pred_check
      _
    $region3: #{tpu_custom_call.1} parent=1 // pred_check_branch
      %16 = sbr.rel (0) target = $region5
    $region4: #{tpu_custom_call.1} parent=1 // pred_region
      %s18 = ssub.s32 128, 128
      %19 = vsyncadd [#allocation6], %s18
      %s21 = sshll.u32 [#allocation5], 4
      %s22 = int_to_ptr.vmem [resolvable:$true] %s21
      %24 = dma.hbm_to_vmem [thread:$0]  %s0, 128, %s22, [#allocation6]
    $region5: #{tpu_custom_call.1} parent=1 // pred_fallthru
      _
    // Predicated region
    $region6: #{tpu_custom_call.1} parent=1 // pred_check
      _
    $region7: #{tpu_custom_call.1} parent=1 // pred_check_branch
      %26 = sbr.rel (0) target = $region9
    $region8: #{tpu_custom_call.1} parent=1 // pred_region
      %s28 = ssub.s32 384, 384
      %29 = vsyncadd [#allocation9], %s28
      %s30 = sshll.u32 [#allocation8], 4
      %s31 = int_to_ptr.vmem [resolvable:$true] %s30
      %36 = dma.hbm_to_vmem [thread:$0]  %s1, 384, %s31, [#allocation9], 64, 64, 4
    $region9: #{tpu_custom_call.1} parent=1 // pred_fallthru
      _
    // Predicated region
    $region10: #{tpu_custom_call.1} parent=1 // pred_check
      _
    $region11: #{tpu_custom_call.1} parent=1 // pred_check_branch
      %38 = sbr.rel (0) target = $region13
    $region12: #{tpu_custom_call.1} parent=1 // pred_region
      %s40 = ssub.s32 1024, 1024
      %41 = vsyncadd [#allocation9], %s40
      %s42 = sshll.u32 [#allocation10], 4
      %s43 = int_to_ptr.vmem [resolvable:$true] %s42
      %48 = dma.hbm_to_vmem [thread:$0]  %s2, 1024, %s43, [#allocation9], 64, 64, 4
    $region13: #{tpu_custom_call.1} parent=1 // pred_fallthru
      _
    // Predicated region
    $region14: #{tpu_custom_call.1} parent=1 // pred_check
      _
    $region15: #{tpu_custom_call.1} parent=1 // pred_check_branch
      %50 = sbr.rel (0) target = $region17
    $region16: #{tpu_custom_call.1} parent=1 // pred_region
      %s52 = ssub.s32 1024, 1024
      %53 = vsyncadd [#allocation12], %s52
      %s54 = sshll.u32 [#allocation11], 4
      %s55 = int_to_ptr.vmem [resolvable:$true] %s54
      %60 = dma.hbm_to_vmem [thread:$0]  %s3, 1024, %s55, [#allocation12], 64, 64, 4
    $region17: #{tpu_custom_call.1} parent=1 // pred_fallthru
      _
    // Predicated region
    $region18: #{tpu_custom_call.1} parent=1 // pred_check
      _
    $region19: #{tpu_custom_call.1} parent=1 // pred_check_branch
      %62 = sbr.rel (0) target = $region21
    $region20: #{tpu_custom_call.1} parent=1 // pred_region
      _
    $region21: #{tpu_custom_call.1} parent=1 // pred_fallthru
      _
    // Predicated region
    $region22: #{tpu_custom_call.1} parent=1 // pred_check
      _
    $region23: #{tpu_custom_call.1} parent=1 // pred_check_branch
      %64 = sbr.rel (0) target = $region25
    $region24: #{tpu_custom_call.1} parent=1 // pred_region
      _
    $region25: #{tpu_custom_call.1} parent=1 // pred_fallthru
      _
    // Predicated region
    $region26: #{tpu_custom_call.1} parent=1 // pred_check
      _
    $region27: #{tpu_custom_call.1} parent=1 // pred_check_branch
      %66 = sbr.rel (0) target = $region29
    $region28: #{tpu_custom_call.1} parent=1 // pred_region
      %67 = dma.done [#allocation6], 128
    $region29: #{tpu_custom_call.1} parent=1 // pred_fallthru
      _
    // Predicated region
    $region30: #{tpu_custom_call.1} parent=1 // pred_check
      _
    $region31: #{tpu_custom_call.1} parent=1 // pred_check_branch
      %69 = sbr.rel (0) target = $region33
    $region32: #{tpu_custom_call.1} parent=1 // pred_region
      %70 = dma.done [#allocation9], 384
    $region33: #{tpu_custom_call.1} parent=1 // pred_fallthru
      _
    // Predicated region
    $region34: #{tpu_custom_call.1} parent=1 // pred_check
      _
    $region35: #{tpu_custom_call.1} parent=1 // pred_check_branch
      %72 = sbr.rel (0) target = $region37
    $region36: #{tpu_custom_call.1} parent=1 // pred_region
      %73 = dma.done [#allocation9], 1024
    $region37: #{tpu_custom_call.1} parent=1 // pred_fallthru
      _
    // Predicated region
    $region38: #{tpu_custom_call.1} parent=1 // pred_check
      _
    $region39: #{tpu_custom_call.1} parent=1 // pred_check_branch
      %75 = sbr.rel (0) target = $region41
    $region40: #{tpu_custom_call.1} parent=1 // pred_region
      %76 = dma.done [#allocation12], 1024
    $region41: #{tpu_custom_call.1} parent=1 // pred_fallthru
      _
    %p78 = scmp.eq.s32.totalorder 0, 0
    // Predicated region
    $region42: #{tpu_custom_call.1} parent=1 // pred_check
      %p79 = pneg %p78
    $region43: #{tpu_custom_call.1} parent=1 // pred_check_branch
      %81 = sbr.rel (%p79) target = $region45
    $region44: #{tpu_custom_call.1} parent=1 // pred_region
      %82 = vst [vmem:[#allocation3] sm:$0x1] 0.0
      %83 = vst [vmem:[#allocation4] sm:$0x1] 0.0
    $region45: #{tpu_custom_call.1} parent=1 // pred_fallthru
      _
    %v84 = vld [vmem:[%s4] sm:$0x1]
    %v85 = vld [vmem:[#allocation5] sm:$0xff]
    %v86 = vpack.c.bf16 %v85, %v85
    %v87 = vld [vmem:[#allocation8] sm:$0xf]
    %v88 = vld [vmem:[#allocation8 + $0x4] sm:$0xf]
    %v89 = vld [vmem:[#allocation8 + $0x8] sm:$0xf]
    %v90 = vld [vmem:[#allocation8 + $0xc] sm:$0xf]
    %v91 = vld [vmem:[#allocation8 + $0x10] sm:$0xf]
    %v92 = vld [vmem:[#allocation8 + $0x14] sm:$0xf]
    %v93 = vlaneseq
    %v94 = vshrl.u32 %v93, 7
    %v95 = vsub.s32 0, %v94
    %v96 = vrot.slane %v84, %v95
    %v103 = vunpack.c.l.b16 %v87
    %v104 = vunpack.c.l.b16 %v88
    %v105 = vunpack.c.l.b16 %v89
    %v106 = vunpack.c.l.b16 %v90
    %v107 = vunpack.c.l.b16 %v91
    %v108 = vunpack.c.l.b16 %v92
    %v109 = vpack.c.b16 %v104, %v103
    %v110 = vpack.c.b16 %v106, %v105
    %v111 = vpack.c.b16 %v108, %v107
    %vm115 = vcmask 392192
    %v117 = vsel %vm115, %v86, 0
    %119 = vmatprep.subr.bf16.mxu0 0
    %120 = vmatpush1.bf16.msra.mxu0 %v109
    %121 = vmatprep.subr.bf16.mxu0 0
    %122 = vmatpush1.bf16.msra.mxu0 %v110
    %123 = vmatprep.subr.bf16.mxu0 0
    %124 = vmatpush1.bf16.msra.mxu0 %v111
    %125 = vmatprep.subr.bf16.mxu0 0
    %126 = vmatpush1.bf16.msra.mxu0 0
    %127 = vmatprep.subr.bf16.mxu0 0
    %128 = vmatpush1.bf16.msra.mxu0 0
    %129 = vmatprep.subr.bf16.mxu0 0
    %130 = vmatpush1.bf16.msra.mxu0 0
    %131 = vmatprep.subr.bf16.mxu0 0
    %132 = vmatpush1.bf16.msra.mxu0 0
    %133 = vmatprep.subr.bf16.mxu0 0
    %134 = vmatpush1.bf16.msra.mxu0 0
    %135 = vmatprep.subr.bf16.mxu0 0
    %136 = vmatpush1.bf16.msra.mxu0 0
    %137 = vmatprep.subr.bf16.mxu0 0
    %138 = vmatpush1.bf16.msra.mxu0 0
    %139 = vmatprep.subr.bf16.mxu0 0
    %140 = vmatpush1.bf16.msra.mxu0 0
    %141 = vmatprep.subr.bf16.mxu0 0
    %142 = vmatpush1.bf16.msra.mxu0 0
    %143 = vmatprep.subr.bf16.mxu0 0
    %144 = vmatpush1.bf16.msra.mxu0 0
    %145 = vmatprep.subr.bf16.mxu0 0
    %146 = vmatpush1.bf16.msra.mxu0 0
    %147 = vmatprep.subr.bf16.mxu0 0
    %148 = vmatpush1.bf16.msra.mxu0 0
    %149 = vmatprep.subr.bf16.mxu0 0
    %150 = vmatpush1.bf16.msra.mxu0 0
    %151 = vmatprep.mubr.bf16.mxu0 0
    %152 = vmatmul.mubr.bf16.gmra.mrb[0].mxu0 %v117
    %v153 = vpop.f32.mrb[0].mxu0
    %v154 = vadd.f32 %v96, %v153
    %v155 = vpop.f32.mrb[0].mxu0
    %v156 = vpop.f32.mrb[0].mxu0
    %v157 = vpop.f32.mrb[0].mxu0
    %158 = vdwg.mxu0
    %v159 = vmul.f32 %v154, 0.5
    %v160 = vmul.f32 %v154, 0.70710677
    %v161 = verf.f32.pop %v160
    %v162 = vadd.f32 %v161, 1.0
    %v163 = vmul.f32 %v159, %v162
    %v164 = vld [vmem:[#allocation3] sm:$0x1]
    %v165 = vrot.slane %v163, 4
    %v166 = vadd.f32 %v163, %v165
    %v167 = vrot.slane %v166, 2
    %v168 = vadd.f32 %v166, %v167
    %v169 = vrot.slane %v168, 1
    %v170 = vadd.f32 %v168, %v169
    %v171 = vadd.f32 %v164, %v170
    %172 = vst [vmem:[#allocation3] sm:$0x1] %v171
    %v173 = vld [vmem:[#allocation4] sm:$0x1]
    %v174 = vmul.f32 %v163, %v163
    %v175 = vrot.slane %v174, 4
    %v176 = vadd.f32 %v174, %v175
    %v177 = vrot.slane %v176, 2
    %v178 = vadd.f32 %v176, %v177
    %v179 = vrot.slane %v178, 1
    %v180 = vadd.f32 %v178, %v179
    %v181 = vadd.f32 %v173, %v180
    %182 = vst [vmem:[#allocation4] sm:$0x1] %v181
    %s183 = smul.u32 0, 8
    %s184 = scalar_lea.vmem [#allocation2], %s183
    %185 = vst [vmem:[%s184] sm:$0xff] %v163
    // Predicated region
    $region46: #{tpu_custom_call.1} parent=1 // pred_check
      %p186 = pneg %p78
    $region47: #{tpu_custom_call.1} parent=1 // pred_check_branch
      %188 = sbr.rel (%p186) target = $region49
    $region48: #{tpu_custom_call.1} parent=1 // pred_region
      %v189 = vld [vmem:[%s4 + $0x1] sm:$0x1]
      %v190 = vld [vmem:[%s4 + $0x2] sm:$0x1]
      %v191 = vld [vmem:[#allocation3] sm:$0x1]
      %v192 = vmul.f32 %v191, 0.125
      %v193 = vld [vmem:[#allocation4] sm:$0x1]
      %v194 = vmul.f32 %v193, 0.125
      %v195 = vmul.f32 %v192, %v192
      %v196 = vsub.f32 %v194, %v195
      %v197 = vadd.f32 %v196, 1e-05
      %v198 = vrsqrt.pop %v197
      %v199 = vmul.f32 %v189, %v198
      %v200 = vmul.f32 %v192, %v199
      %v201 = vsub.f32 %v190, %v200
      %202 = vst [vmem:[#allocation3] sm:$0x1] 0.0
      %203 = vst [vmem:[#allocation4] sm:$0x1] 0.0
      %v204 = vld [vmem:[%s4 + $0x3] sm:$0x1]
      %v205 = vld [vmem:[#allocation2] sm:$0xff]
      %v206 = vlaneseq
      %v207 = vshrl.u32 %v206, 7
      %v208 = vsub.s32 0, %v207
      %v209 = vrot.slane %v199, %v208
      %v210 = vmul.f32 %v205, %v209
      %v211 = vlaneseq
      %v212 = vshrl.u32 %v211, 7
      %v213 = vsub.s32 0, %v212
      %v214 = vrot.slane %v201, %v213
      %v215 = vadd.f32 %v210, %v214
      %v216 = vmul.f32 %v215, 0.5
      %v217 = vmul.f32 %v215, 0.70710677
      %v218 = verf.f32.pop %v217
      %v219 = vadd.f32 %v218, 1.0
      %v220 = vmul.f32 %v216, %v219
      %v221 = vpack.c.bf16 %v220, %v220
      %v222 = vld [vmem:[#allocation10] sm:$0xf]
      %v223 = vld [vmem:[#allocation10 + $0x4] sm:$0xf]
      %v224 = vld [vmem:[#allocation10 + $0x8] sm:$0xf]
      %v225 = vld [vmem:[#allocation10 + $0xc] sm:$0xf]
      %v226 = vld [vmem:[#allocation10 + $0x10] sm:$0xf]
      %v227 = vld [vmem:[#allocation10 + $0x14] sm:$0xf]
      %v228 = vld [vmem:[#allocation10 + $0x18] sm:$0xf]
      %v229 = vld [vmem:[#allocation10 + $0x1c] sm:$0xf]
      %v230 = vld [vmem:[#allocation10 + $0x20] sm:$0xf]
      %v231 = vld [vmem:[#allocation10 + $0x24] sm:$0xf]
      %v232 = vld [vmem:[#allocation10 + $0x28] sm:$0xf]
      %v233 = vld [vmem:[#allocation10 + $0x2c] sm:$0xf]
      %v234 = vld [vmem:[#allocation10 + $0x30] sm:$0xf]
      %v235 = vld [vmem:[#allocation10 + $0x34] sm:$0xf]
      %v236 = vld [vmem:[#allocation10 + $0x38] sm:$0xf]
      %v237 = vld [vmem:[#allocation10 + $0x3c] sm:$0xf]
      %v238 = vlaneseq
      %v239 = vshrl.u32 %v238, 7
      %v240 = vsub.s32 0, %v239
      %v241 = vrot.slane %v204, %v240
      %v258 = vunpack.c.l.b16 %v222
      %v259 = vunpack.c.l.b16 %v223
      %v260 = vunpack.c.l.b16 %v224
      %v261 = vunpack.c.l.b16 %v225
      %v262 = vunpack.c.l.b16 %v226
      %v263 = vunpack.c.l.b16 %v227
      %v264 = vunpack.c.l.b16 %v228
      %v265 = vunpack.c.l.b16 %v229
      %v266 = vunpack.c.l.b16 %v230
      %v267 = vunpack.c.l.b16 %v231
      %v268 = vunpack.c.l.b16 %v232
      %v269 = vunpack.c.l.b16 %v233
      %v270 = vunpack.c.l.b16 %v234
      %v271 = vunpack.c.l.b16 %v235
      %v272 = vunpack.c.l.b16 %v236
      %v273 = vunpack.c.l.b16 %v237
      %v274 = vpack.c.b16 %v259, %v258
      %v275 = vpack.c.b16 %v261, %v260
      %v276 = vpack.c.b16 %v263, %v262
      %v277 = vpack.c.b16 %v265, %v264
      %v278 = vpack.c.b16 %v267, %v266
      %v279 = vpack.c.b16 %v269, %v268
      %v280 = vpack.c.b16 %v271, %v270
      %v281 = vpack.c.b16 %v273, %v272
      %290 = vmatprep.subr.bf16.mxu0 0
      %291 = vmatpush1.bf16.msra.mxu0 %v274
      %292 = vmatprep.subr.bf16.mxu0 0
      %293 = vmatpush1.bf16.msra.mxu0 %v275
      %294 = vmatprep.subr.bf16.mxu0 0
      %295 = vmatpush1.bf16.msra.mxu0 %v276
      %296 = vmatprep.subr.bf16.mxu0 0
      %297 = vmatpush1.bf16.msra.mxu0 %v277
      %298 = vmatprep.subr.bf16.mxu0 0
      %299 = vmatpush1.bf16.msra.mxu0 %v278
      %300 = vmatprep.subr.bf16.mxu0 0
      %301 = vmatpush1.bf16.msra.mxu0 %v279
      %302 = vmatprep.subr.bf16.mxu0 0
      %303 = vmatpush1.bf16.msra.mxu0 %v280
      %304 = vmatprep.subr.bf16.mxu0 0
      %305 = vmatpush1.bf16.msra.mxu0 %v281
      %306 = vmatprep.subr.bf16.mxu0 0
      %307 = vmatpush1.bf16.msra.mxu0 0
      %308 = vmatprep.subr.bf16.mxu0 0
      %309 = vmatpush1.bf16.msra.mxu0 0
      %310 = vmatprep.subr.bf16.mxu0 0
      %311 = vmatpush1.bf16.msra.mxu0 0
      %312 = vmatprep.subr.bf16.mxu0 0
      %313 = vmatpush1.bf16.msra.mxu0 0
      %314 = vmatprep.subr.bf16.mxu0 0
      %315 = vmatpush1.bf16.msra.mxu0 0
      %316 = vmatprep.subr.bf16.mxu0 0
      %317 = vmatpush1.bf16.msra.mxu0 0
      %318 = vmatprep.subr.bf16.mxu0 0
      %319 = vmatpush1.bf16.msra.mxu0 0
      %320 = vmatprep.subr.bf16.mxu0 0
      %321 = vmatpush1.bf16.msra.mxu0 0
      %322 = vmatprep.mubr.bf16.mxu0 0
      %323 = vmatmul.mubr.bf16.gmra.mrb[0].mxu0 %v221
      %v324 = vpop.f32.mrb[0].mxu0
      %v325 = vadd.f32 %v241, %v324
      %v326 = vpop.f32.mrb[0].mxu0
      %v327 = vpop.f32.mrb[0].mxu0
      %v328 = vpop.f32.mrb[0].mxu0
      %329 = vdwg.mxu0
      %v330 = vmul.f32 %v325, 0.5
      %v331 = vmul.f32 %v325, 0.70710677
      %v332 = verf.f32.pop %v331
      %v333 = vadd.f32 %v332, 1.0
      %v334 = vmul.f32 %v330, %v333
      %v335 = vld [vmem:[#allocation3] sm:$0x1]
      %v336 = vrot.slane %v334, 4
      %v337 = vadd.f32 %v334, %v336
      %v338 = vrot.slane %v337, 2
      %v339 = vadd.f32 %v337, %v338
      %v340 = vrot.slane %v339, 1
      %v341 = vadd.f32 %v339, %v340
      %v342 = vadd.f32 %v335, %v341
      %343 = vst [vmem:[#allocation3] sm:$0x1] %v342
      %v344 = vld [vmem:[#allocation4] sm:$0x1]
      %v345 = vmul.f32 %v334, %v334
      %v346 = vrot.slane %v345, 4
      %v347 = vadd.f32 %v345, %v346
      %v348 = vrot.slane %v347, 2
      %v349 = vadd.f32 %v347, %v348
      %v350 = vrot.slane %v349, 1
      %v351 = vadd.f32 %v349, %v350
      %v352 = vadd.f32 %v344, %v351
      %353 = vst [vmem:[#allocation4] sm:$0x1] %v352
      %354 = vst [vmem:[#allocation2] sm:$0xff] %v334
      %v355 = vld [vmem:[%s4 + $0x4] sm:$0x1]
      %v356 = vld [vmem:[%s4 + $0x5] sm:$0x1]
      %v357 = vld [vmem:[#allocation3] sm:$0x1]
      %v358 = vmul.f32 %v357, 0.125
      %v359 = vld [vmem:[#allocation4] sm:$0x1]
      %v360 = vmul.f32 %v359, 0.125
      %v361 = vmul.f32 %v358, %v358
      %v362 = vsub.f32 %v360, %v361
      %v363 = vadd.f32 %v362, 1e-05
      %v364 = vrsqrt.pop %v363
      %v365 = vmul.f32 %v355, %v364
      %v366 = vmul.f32 %v358, %v365
      %v367 = vsub.f32 %v356, %v366
      %v368 = vld [vmem:[%s5] sm:$0x1]
      %v369 = vld [vmem:[#allocation2] sm:$0xff]
      %v370 = vlaneseq
      %v371 = vshrl.u32 %v370, 7
      %v372 = vsub.s32 0, %v371
      %v373 = vrot.slane %v365, %v372
      %v374 = vmul.f32 %v369, %v373
      %v375 = vlaneseq
      %v376 = vshrl.u32 %v375, 7
      %v377 = vsub.s32 0, %v376
      %v378 = vrot.slane %v367, %v377
      %v379 = vadd.f32 %v374, %v378
      %v380 = vmul.f32 %v379, 0.5
      %v381 = vmul.f32 %v379, 0.70710677
      %v382 = verf.f32.pop %v381
      %v383 = vadd.f32 %v382, 1.0
      %v384 = vmul.f32 %v380, %v383
      %v385 = vpack.c.bf16 %v384, %v384
      %v386 = vld [vmem:[#allocation11] sm:$0xf]
      %v387 = vld [vmem:[#allocation11 + $0x4] sm:$0xf]
      %v388 = vld [vmem:[#allocation11 + $0x8] sm:$0xf]
      %v389 = vld [vmem:[#allocation11 + $0xc] sm:$0xf]
      %v390 = vld [vmem:[#allocation11 + $0x10] sm:$0xf]
      %v391 = vld [vmem:[#allocation11 + $0x14] sm:$0xf]
      %v392 = vld [vmem:[#allocation11 + $0x18] sm:$0xf]
      %v393 = vld [vmem:[#allocation11 + $0x1c] sm:$0xf]
      %v394 = vld [vmem:[#allocation11 + $0x20] sm:$0xf]
      %v395 = vld [vmem:[#allocation11 + $0x24] sm:$0xf]
      %v396 = vld [vmem:[#allocation11 + $0x28] sm:$0xf]
      %v397 = vld [vmem:[#allocation11 + $0x2c] sm:$0xf]
      %v398 = vld [vmem:[#allocation11 + $0x30] sm:$0xf]
      %v399 = vld [vmem:[#allocation11 + $0x34] sm:$0xf]
      %v400 = vld [vmem:[#allocation11 + $0x38] sm:$0xf]
      %v401 = vld [vmem:[#allocation11 + $0x3c] sm:$0xf]
      %v403 = vlaneseq
      %v404 = vshrl.u32 %v403, 7
      %v405 = vsub.s32 0, %v404
      %v406 = vrot.slane %v368, %v405
      %v424 = vunpack.c.l.b16 %v386
      %v425 = vunpack.c.l.b16 %v387
      %v426 = vunpack.c.l.b16 %v388
      %v427 = vunpack.c.l.b16 %v389
      %v428 = vunpack.c.l.b16 %v390
      %v429 = vunpack.c.l.b16 %v391
      %v430 = vunpack.c.l.b16 %v392
      %v431 = vunpack.c.l.b16 %v393
      %v432 = vunpack.c.l.b16 %v394
      %v433 = vunpack.c.l.b16 %v395
      %v434 = vunpack.c.l.b16 %v396
      %v435 = vunpack.c.l.b16 %v397
      %v436 = vunpack.c.l.b16 %v398
      %v437 = vunpack.c.l.b16 %v399
      %v438 = vunpack.c.l.b16 %v400
      %v439 = vunpack.c.l.b16 %v401
      %v440 = vpack.c.b16 %v425, %v424
      %v441 = vpack.c.b16 %v427, %v426
      %v442 = vpack.c.b16 %v429, %v428
      %v443 = vpack.c.b16 %v431, %v430
      %v444 = vpack.c.b16 %v433, %v432
      %v445 = vpack.c.b16 %v435, %v434
      %v446 = vpack.c.b16 %v437, %v436
      %v447 = vpack.c.b16 %v439, %v438
      %456 = vmatprep.subr.bf16.mxu0 0
      %457 = vmatpush1.bf16.msra.mxu0 %v440
      %458 = vmatprep.subr.bf16.mxu0 0
      %459 = vmatpush1.bf16.msra.mxu0 %v441
      %460 = vmatprep.subr.bf16.mxu0 0
      %461 = vmatpush1.bf16.msra.mxu0 %v442
      %462 = vmatprep.subr.bf16.mxu0 0
      %463 = vmatpush1.bf16.msra.mxu0 %v443
      %464 = vmatprep.subr.bf16.mxu0 0
      %465 = vmatpush1.bf16.msra.mxu0 %v444
      %466 = vmatprep.subr.bf16.mxu0 0
      %467 = vmatpush1.bf16.msra.mxu0 %v445
      %468 = vmatprep.subr.bf16.mxu0 0
      %469 = vmatpush1.bf16.msra.mxu0 %v446
      %470 = vmatprep.subr.bf16.mxu0 0
      %471 = vmatpush1.bf16.msra.mxu0 %v447
      %472 = vmatprep.subr.bf16.mxu0 0
      %473 = vmatpush1.bf16.msra.mxu0 0
      %474 = vmatprep.subr.bf16.mxu0 0
      %475 = vmatpush1.bf16.msra.mxu0 0
      %476 = vmatprep.subr.bf16.mxu0 0
      %477 = vmatpush1.bf16.msra.mxu0 0
      %478 = vmatprep.subr.bf16.mxu0 0
      %479 = vmatpush1.bf16.msra.mxu0 0
      %480 = vmatprep.subr.bf16.mxu0 0
      %481 = vmatpush1.bf16.msra.mxu0 0
      %482 = vmatprep.subr.bf16.mxu0 0
      %483 = vmatpush1.bf16.msra.mxu0 0
      %484 = vmatprep.subr.bf16.mxu0 0
      %485 = vmatpush1.bf16.msra.mxu0 0
      %486 = vmatprep.subr.bf16.mxu0 0
      %487 = vmatpush1.bf16.msra.mxu0 0
      %488 = vmatprep.mubr.bf16.mxu0 0
      %489 = vmatmul.mubr.bf16.gmra.mrb[0].mxu0 %v385
      %v490 = vpop.f32.mrb[0].mxu0
      %v491 = vadd.f32 %v406, %v490
      %v492 = vpop.f32.mrb[0].mxu0
      %v493 = vpop.f32.mrb[0].mxu0
      %v494 = vpop.f32.mrb[0].mxu0
      %495 = vdwg.mxu0
      %496 = vst [vmem:[#allocation13] sm:$0xff] %v491
    $region49: #{tpu_custom_call.1} parent=1 // pred_fallthru
      _
    // Predicated region
    $region50: #{tpu_custom_call.1} parent=1 // pred_check
      _
    $region51: #{tpu_custom_call.1} parent=1 // pred_check_branch
      %498 = sbr.rel (0) target = $region53
    $region52: #{tpu_custom_call.1} parent=1 // pred_region
      %s500 = ssub.s32 128, 128
      %501 = vsyncadd [#allocation7], %s500
      %s503 = sshll.u32 [#allocation13], 4
      %s504 = int_to_ptr.vmem [resolvable:$true] %s503
      %506 = dma.vmem_to_hbm [thread:$0]  %s504, 128, %s6, [#allocation7]
    $region53: #{tpu_custom_call.1} parent=1 // pred_fallthru
      _
    // Predicated region
    $region54: #{tpu_custom_call.1} parent=1 // pred_check
      _
    $region55: #{tpu_custom_call.1} parent=1 // pred_check_branch
      %508 = sbr.rel (0) target = $region57
    $region56: #{tpu_custom_call.1} parent=1 // pred_region
      %509 = dma.done [#allocation7], 128
    $region57: #{tpu_custom_call.1} parent=1 // pred_fallthru
      _
    %510 = vsyncpa [#allocation6], 1
    %511 = vsyncpa [#allocation9], 1
    %512 = vsyncpa [#allocation12], 1
    %513 = vsyncpa [#allocation7], 1

</llo_original>
